<compile_context>
chip_gen: v6e
topology: v6e:2x2x1
jax: 0.10.0
libtpu: 0.0.40
codegen_flags: <defaults>
</compile_context>

<pallas_src>
import functools

import jax
import jax.numpy as jnp
from jax.experimental import pallas as pl
from jax.experimental.pallas import tpu as pltpu

_LANES = 128


def _tversky_partial_kernel(p_ref, t_ref, out_ref, *, block_rows, chunk_rows):
    """Per-block partial sums of (p*t, p, t) as lane-dense (8,128) vectors."""
    steps = block_rows // chunk_rows
    zero = jnp.zeros((chunk_rows, _LANES), jnp.float32)

    def body(j, carry):
        acc_pt, acc_p, acc_t = carry
        r = pl.multiple_of(j * chunk_rows, chunk_rows)
        # Cast in-kernel: bf16/int inputs stream HBM->VMEM at native width.
        p = p_ref[pl.ds(r, chunk_rows), :].astype(jnp.float32)
        t = t_ref[pl.ds(r, chunk_rows), :].astype(jnp.float32)
        return acc_pt + p * t, acc_p + p, acc_t + t

    acc_pt, acc_p, acc_t = jax.lax.fori_loop(
        0, steps, body, (zero, zero, zero), unroll=min(8, steps))

    def _fold(a):
        # Fold sub-32-bit chunk accumulators (16 or 32 rows) down to (8,128).
        if chunk_rows == 8:
            return a
        return jnp.sum(a.reshape(chunk_rows // 8, 8, _LANES), axis=0)

    out_ref[0, 0] = _fold(acc_pt)   # partial sum(p*t)
    out_ref[0, 1] = _fold(acc_p)    # partial sum(p)
    out_ref[0, 2] = _fold(acc_t)    # partial sum(t)


def tversky_loss(pred, target, alpha=0.3, beta=0.7, smooth=1.0,
                 target_block_bytes=4 * 1024 * 1024):
    """Pallas TPU implementation of TverskyLoss.forward."""
    assert pred.shape == target.shape

    p_flat = jnp.reshape(pred, (-1,))
    t_flat = jnp.reshape(target, (-1,))
    n = p_flat.shape[0]

    itemsizes = (jnp.dtype(pred.dtype).itemsize, jnp.dtype(target.dtype).itemsize)
    # Sublane-packing multiple (8 f32, 16 bf16, 32 int8) -> also the per-step
    # chunk height inside the kernel.
    sub_mult = max(8, max(32 // s for s in itemsizes))
    bytes_per_row = _LANES * sum(itemsizes)            # one row of p + one of t
    # ~target_block_bytes per operand per pipeline buffer.
    target_rows = max(
        sub_mult,
        ((2 * target_block_bytes) // bytes_per_row) // sub_mult * sub_mult)

    rows_total = n // _LANES                           # full 128-lane rows

    # Block height: big (bytes-targeted), multiple of sub_mult, and shrunk so
    # there are >= 2 grid blocks (v7x megacore) whenever the input allows it.
    if rows_total >= 2 * sub_mult:
        half = (rows_total // 2) // sub_mult * sub_mult
        br = int(min(target_rows, max(sub_mult, half)))
        num_blocks = rows_total // br
        kernel_rows = num_blocks * br
    else:
        br = 0
        num_blocks = 0
        kernel_rows = 0

    if num_blocks:
        kernel_elems = kernel_rows * _LANES
        # Metadata-only when n is a multiple of 128 (the common case); the
        # prefix slice only materializes for ragged flat lengths.
        p2d = jnp.reshape(p_flat[:kernel_elems], (kernel_rows, _LANES))
        t2d = jnp.reshape(t_flat[:kernel_elems], (kernel_rows, _LANES))

        kernel = functools.partial(
            _tversky_partial_kernel, block_rows=br, chunk_rows=sub_mult)

        # VMEM budget: 2 operands x 2 pipeline buffers x (br x 128) window,
        # plus slack for outputs/scratch.  Explicit so v5e's 16 MiB scoped
        # default does not clip the enlarged tiles; stays << v7x's 64 MiB.
        window_bytes = br * bytes_per_row
        vmem_limit = int(min(2 * window_bytes + (4 << 20), 48 << 20))

        cost = pl.CostEstimate(
            flops=2 * kernel_elems,
            transcendentals=0,
            bytes_accessed=kernel_rows * bytes_per_row
            + num_blocks * 3 * 8 * _LANES * 4,
        )

        partials = pl.pallas_call(
            kernel,
            out_shape=jax.ShapeDtypeStruct((num_blocks, 3, 8, _LANES),
                                           jnp.float32),
            grid_spec=pltpu.PrefetchScalarGridSpec(
                num_scalar_prefetch=0,
                grid=(num_blocks,),
                in_specs=[
                    pl.BlockSpec((br, _LANES), lambda i: (i, 0)),
                    pl.BlockSpec((br, _LANES), lambda i: (i, 0)),
                ],
                out_specs=pl.BlockSpec((1, 3, 8, _LANES),
                                       lambda i: (i, 0, 0, 0)),
            ),
            compiler_params=pltpu.CompilerParams(
                dimension_semantics=("parallel",),
                vmem_limit_bytes=vmem_limit),
            cost_estimate=cost,
        )(p2d, t2d)

        ksums = jnp.sum(partials, axis=(0, 2, 3))      # (3,)
        tp, sum_p, sum_t = ksums[0], ksums[1], ksums[2]
    else:
        tp = jnp.float32(0.0)
        sum_p = jnp.float32(0.0)
        sum_t = jnp.float32(0.0)

    # Tiny JAX epilogue: ragged trailing rows + <128-element flat tail.
    rem_start = kernel_rows * _LANES
    if rem_start < n:
        p_rem = p_flat[rem_start:].astype(jnp.float32)
        t_rem = t_flat[rem_start:].astype(jnp.float32)
        tp = tp + jnp.sum(p_rem * t_rem)
        sum_p = sum_p + jnp.sum(p_rem)
        sum_t = sum_t + jnp.sum(t_rem)

    fp = sum_p - tp            # sum((1 - t) * p) = sum(p) - tp
    fn = sum_t - tp            # sum(t * (1 - p)) = sum(t) - tp
    tversky = (tp + smooth) / (tp + alpha * fp + beta * fn + smooth)
    return 1.0 - tversky


def tversky_loss_ref(pred, target, alpha=0.3, beta=0.7, smooth=1.0):
    """Pure-JAX reference mirroring the PyTorch forward."""
    p = jnp.reshape(pred, (-1,)).astype(jnp.float32)
    t = jnp.reshape(target, (-1,)).astype(jnp.float32)
    tp = jnp.sum(p * t)
    fp = jnp.sum((1.0 - t) * p)
    fn = jnp.sum(t * (1.0 - p))
    tversky = (tp + smooth) / (tp + alpha * fp + beta * fn + smooth)
    return 1.0 - tversky


if __name__ == "__main__":
    key = jax.random.PRNGKey(0)
    k1, k2 = jax.random.split(key)

    # Segmentation-style inputs: NCHW predictions in [0,1], binary targets.
    pred = jax.nn.sigmoid(jax.random.normal(k1, (2, 4, 16, 16), jnp.float32))
    target = (jax.random.uniform(k2, (2, 4, 16, 16)) > 0.5).astype(jnp.float32)

    loss = tversky_loss(pred, target)
    loss = jax.block_until_ready(loss)

    ref = tversky_loss_ref(pred, target)
    assert jnp.allclose(loss, ref, atol=1e-5, rtol=1e-5), (loss, ref)

    print("KERNEL_OK")
</pallas_src>

<mosaic_0001>
module attributes {stable_mosaic.version = 11 : i64} {
  func.func @_tversky_partial_kernel(%arg0: i32, %arg1: memref<8x128xf32, #tpu.memory_space<vmem>>, %arg2: memref<8x128xf32, #tpu.memory_space<vmem>>, %arg3: memref<1x3x8x128xf32, #tpu.memory_space<vmem>>) attributes {dimension_semantics = [#tpu.dimension_semantics<parallel>], iteration_bounds = array<i64: 2>, scalar_prefetch = 0 : i64, scratch_operands = 0 : i64, tpu.core_type = #tpu.core_type<tc>, window_params = [{transform_indices = @transform_0, window_bounds = array<i64: 8, 128>}, {transform_indices = @transform_1, window_bounds = array<i64: 8, 128>}, {transform_indices = @transform_2, window_bounds = array<i64: 1, 3, 8, 128>}]} {
    %cst = arith.constant 0.000000e+00 : f32
    %0 = vector.broadcast %cst : f32 to vector<8x128xf32>
    %c0_i32 = arith.constant 0 : i32
    %c8_i32 = arith.constant 8 : i32
    %1 = arith.muli %c0_i32, %c8_i32 : i32
    %2 = tpu.assume_multiple %1, 8 : i32
    %3 = arith.index_cast %2 : i32 to index
    %c0 = arith.constant 0 : index
    %4 = vector.load %arg1[%3, %c0] : memref<8x128xf32, #tpu.memory_space<vmem>>, vector<8x128xf32>
    %5 = arith.index_cast %2 : i32 to index
    %c0_0 = arith.constant 0 : index
    %6 = vector.load %arg2[%5, %c0_0] : memref<8x128xf32, #tpu.memory_space<vmem>>, vector<8x128xf32>
    %7 = arith.mulf %4, %6 : vector<8x128xf32>
    %8 = arith.addf %0, %7 : vector<8x128xf32>
    %9 = arith.addf %0, %4 : vector<8x128xf32>
    %10 = arith.addf %0, %6 : vector<8x128xf32>
    %c1_i32 = arith.constant 1 : i32
    %c0_1 = arith.constant 0 : index
    %c0_2 = arith.constant 0 : index
    %c0_3 = arith.constant 0 : index
    %c0_4 = arith.constant 0 : index
    %11 = vector.load %arg3[%c0_1, %c0_2, %c0_3, %c0_4] : memref<1x3x8x128xf32, #tpu.memory_space<vmem>>, vector<1x1x8x128xf32>
    %12 = vector.shape_cast %11 : vector<1x1x8x128xf32> to vector<8x128xf32>
    %13 = vector.shape_cast %8 : vector<8x128xf32> to vector<1x1x8x128xf32>
    tpu.vector_store %arg3[%c0_1, %c0_2, %c0_3, %c0_4], %13 {strides = array<i32>} : memref<1x3x8x128xf32, #tpu.memory_space<vmem>>, vector<1x1x8x128xf32>,
    %c0_5 = arith.constant 0 : index
    %c1 = arith.constant 1 : index
    %c0_6 = arith.constant 0 : index
    %c0_7 = arith.constant 0 : index
    %14 = vector.load %arg3[%c0_5, %c1, %c0_6, %c0_7] : memref<1x3x8x128xf32, #tpu.memory_space<vmem>>, vector<1x1x8x128xf32>
    %15 = vector.shape_cast %14 : vector<1x1x8x128xf32> to vector<8x128xf32>
    %16 = vector.shape_cast %9 : vector<8x128xf32> to vector<1x1x8x128xf32>
    tpu.vector_store %arg3[%c0_5, %c1, %c0_6, %c0_7], %16 {strides = array<i32>} : memref<1x3x8x128xf32, #tpu.memory_space<vmem>>, vector<1x1x8x128xf32>,
    %c0_8 = arith.constant 0 : index
    %c2 = arith.constant 2 : index
    %c0_9 = arith.constant 0 : index
    %c0_10 = arith.constant 0 : index
    %17 = vector.load %arg3[%c0_8, %c2, %c0_9, %c0_10] : memref<1x3x8x128xf32, #tpu.memory_space<vmem>>, vector<1x1x8x128xf32>
    %18 = vector.shape_cast %17 : vector<1x1x8x128xf32> to vector<8x128xf32>
    %19 = vector.shape_cast %10 : vector<8x128xf32> to vector<1x1x8x128xf32>
    tpu.vector_store %arg3[%c0_8, %c2, %c0_9, %c0_10], %19 {strides = array<i32>} : memref<1x3x8x128xf32, #tpu.memory_space<vmem>>, vector<1x1x8x128xf32>,
    return
  }
  func.func @transform_0(%arg0: i32) -> (i32, i32) {
    %c0_i32 = arith.constant 0 : i32
    %c0_i32_0 = arith.constant 0 : i32
    return %arg0, %c0_i32 : i32, i32
  }
  func.func @transform_1(%arg0: i32) -> (i32, i32) {
    %c0_i32 = arith.constant 0 : i32
    %c0_i32_0 = arith.constant 0 : i32
    return %arg0, %c0_i32 : i32, i32
  }
  func.func @transform_2(%arg0: i32) -> (i32, i32, i32, i32) {
    %c0_i32 = arith.constant 0 : i32
    %c0_i32_0 = arith.constant 0 : i32
    %c0_i32_1 = arith.constant 0 : i32
    %c0_i32_2 = arith.constant 0 : i32
    return %arg0, %c0_i32, %c0_i32_0, %c0_i32_1 : i32, i32, i32, i32
  }
}

</mosaic_0001>

<llo_original>
// kernel: tpu_custom_call.1
$region0: #{tpu_custom_call.1}
  #allocation0 [shape = 'u32[]', space=smem, size = 0x4, offset = 0x4, fixed_abs, tag = 'smem constant byte address 0x4 - core index']
  #allocation1 [shape = 'u32[144,128]{1,0:T(1,128)}', space=vmem, size = 0x12000, scoped, tag = 'internal scratch']
  %s0 = inlined_call_operand.hbm [shape: f32[16,128], index: 0, kind: input, shape index: {}]
  %s1 = inlined_call_operand.hbm [shape: f32[16,128], index: 1, kind: input, shape index: {}]
  %s2 = inlined_call_operand.hbm [shape: f32[2,3,8,128], index: 2, kind: output, shape index: {}]
  %s3 = sld [smem:[#allocation0]]
  $region49: #{tpu_custom_call.1} parent=0
    _
  %s5 = ssub.s32 1, %s3
  %s6 = scalar_select 0, %s5, %s3
  $region1: #{tpu_custom_call.1} parent=0
    #allocation2 [shape = 'u8[8192]{0}', space=vmem, size = 0x2000, scoped, tag = 'input window, operand 0']
    #allocation3 [shape = 's32[2]{0}', space=sflag, size = 0x8, scoped, tag = 'scoped memory for tpu_custom_call.1']
    #allocation4 [shape = 's32[2]{0}', space=sflag, size = 0x8, scoped, tag = 'scoped memory for tpu_custom_call.1']
    #allocation5 [shape = 'u8[8192]{0}', space=vmem, size = 0x2000, scoped, tag = 'input window, operand 1']
    #allocation6 [shape = 's32[2]{0}', space=sflag, size = 0x8, scoped, tag = 'scoped memory for tpu_custom_call.1']
    #allocation7 [shape = 'u8[24576]{0}', space=vmem, size = 0x6000, scoped, tag = 'output window, operand 0']
    %7 = vsyncpa [#allocation3], 0
    %s8 = scalar_lea.sflag [#allocation3], 1
    %9 = vsyncpa %s8, 0
    %10 = vsyncpa [#allocation6], 0
    %s11 = scalar_lea.sflag [#allocation6], 1
    %12 = vsyncpa %s11, 0
    %13 = vsyncpa [#allocation4], 0
    %s14 = scalar_lea.sflag [#allocation4], 1
    %15 = vsyncpa %s14, 0
    loop: start=0, step=1, limit=4
    $region2: #{tpu_custom_call.1} parent=1 // loop_pre_header
      _
    $region3: #{tpu_custom_call.1} parent=1 // loop_header
      %s17 = sphi 0, %s21
      %p18 = scmp.ge.s32.totalorder %s17, 4
      %s27 = sphi 0, %s29
      %s30 = sphi 0, %s27
      %s31 = sphi 0, %s30
      %s47 = sphi 0, %s31
      %s53 = sphi 0, %s55
      %s56 = sphi 0, %s53
      %s57 = sphi 0, %s56
      %s73 = sphi 0, %s57
      %s79 = sphi 0, %s81
      %s82 = sphi 0, %s79
      %s83 = sphi 0, %s82
      %s99 = sphi 0, %s83
    $region4: #{tpu_custom_call.1} parent=1 // loop_header_branch
      %20 = sbr.rel (%p18) target = $region8
    $region5: #{tpu_custom_call.1} parent=1 // loop_body
      %s22 = ssub.s32 %s17, 1
      %s23 = ssub.s32 %s17, 2
      %s24 = sadd.s32 %s17, 1
      %s25 = ssub.s32 %s17, %s24
      %p26 = scmp.eq.s32.totalorder %s25, 0
      %s28 = sadd.s32 %s27, 1
      %s29 = scalar_select %p26, %s27, %s28
      %p32 = pneg %p26
      %p33 = scmp.eq.s32.totalorder %s17, 1
      %p34 = por %p32, %p33
      %p35 = scmp.ne.s32.totalorder %s27, %s30
      %p36 = scmp.eq.s32.totalorder %s17, 0
      %p37 = por %p35, %p36
      %p38 = scmp.ne.s32.totalorder %s27, %s30
      %p39 = scmp.eq.s32.totalorder %s22, 1
      %p40 = por %p38, %p39
      %p41 = scmp.ne.s32.totalorder %s30, %s31
      %p42 = scmp.eq.s32.totalorder %s22, 0
      %p43 = por %p41, %p42
      %p44 = scmp.ne.s32.totalorder %s30, %s31
      %p45 = scmp.eq.s32.totalorder %s23, 1
      %p46 = por %p44, %p45
      %p48 = scmp.ne.s32.totalorder %s31, %s47
      %p49 = scmp.eq.s32.totalorder %s23, 0
      %p50 = por %p48, %p49
      %s51 = ssub.s32 %s17, %s24
      %p52 = scmp.eq.s32.totalorder %s51, 0
      %s54 = sadd.s32 %s53, 1
      %s55 = scalar_select %p52, %s53, %s54
      %p58 = pneg %p52
      %p59 = scmp.eq.s32.totalorder %s17, 1
      %p60 = por %p58, %p59
      %p61 = scmp.ne.s32.totalorder %s53, %s56
      %p62 = scmp.eq.s32.totalorder %s17, 0
      %p63 = por %p61, %p62
      %p64 = scmp.ne.s32.totalorder %s53, %s56
      %p65 = scmp.eq.s32.totalorder %s22, 1
      %p66 = por %p64, %p65
      %p67 = scmp.ne.s32.totalorder %s56, %s57
      %p68 = scmp.eq.s32.totalorder %s22, 0
      %p69 = por %p67, %p68
      %p70 = scmp.ne.s32.totalorder %s56, %s57
      %p71 = scmp.eq.s32.totalorder %s23, 1
      %p72 = por %p70, %p71
      %p74 = scmp.ne.s32.totalorder %s57, %s73
      %p75 = scmp.eq.s32.totalorder %s23, 0
      %p76 = por %p74, %p75
      %s77 = ssub.s32 %s17, %s24
      %p78 = scmp.eq.s32.totalorder %s77, 0
      %s80 = sadd.s32 %s79, 1
      %s81 = scalar_select %p78, %s79, %s80
      %p84 = pneg %p78
      %p85 = scmp.eq.s32.totalorder %s17, 1
      %p86 = por %p84, %p85
      %p87 = scmp.ne.s32.totalorder %s79, %s82
      %p88 = scmp.eq.s32.totalorder %s17, 0
      %p89 = por %p87, %p88
      %p90 = scmp.ne.s32.totalorder %s79, %s82
      %p91 = scmp.eq.s32.totalorder %s22, 1
      %p92 = por %p90, %p91
      %p93 = scmp.ne.s32.totalorder %s82, %s83
      %p94 = scmp.eq.s32.totalorder %s22, 0
      %p95 = por %p93, %p94
      %p96 = scmp.ne.s32.totalorder %s82, %s83
      %p97 = scmp.eq.s32.totalorder %s23, 1
      %p98 = por %p96, %p97
      %p100 = scmp.ne.s32.totalorder %s83, %s99
      %p101 = scmp.eq.s32.totalorder %s23, 0
      %p102 = por %p100, %p101
      %p103 = scmp.le.s32.totalorder 1, %s17
      %p104 = scmp.lt.s32.totalorder %s17, 3
      %p105 = pnand %p103, %p104
      %p106 = pneg %p105
      // Predicated region
      $region9: #{tpu_custom_call.1} parent=5 // pred_check
        _
      $region10: #{tpu_custom_call.1} parent=5 // pred_check_branch
        %108 = sbr.rel (%p105) target = $region12
      $region11: #{tpu_custom_call.1} parent=5 // pred_region
        %s109 = ssub.s32 %s17, 1
      $region12: #{tpu_custom_call.1} parent=5 // pred_fallthru
        _
      %p110 = scmp.lt.s32.totalorder %s17, 2
      // Predicated region
      $region13: #{tpu_custom_call.1} parent=5 // pred_check
        %p111 = pneg %p110
      $region14: #{tpu_custom_call.1} parent=5 // pred_check_branch
        %113 = sbr.rel (%p111) target = $region16
      $region15: #{tpu_custom_call.1} parent=5 // pred_region
        // Predicated region
        $region17: #{tpu_custom_call.1} parent=15 // pred_check
          %p114 = pneg %p37
        $region18: #{tpu_custom_call.1} parent=15 // pred_check_branch
          %116 = sbr.rel (%p114) target = $region20
        $region19: #{tpu_custom_call.1} parent=15 // pred_region
          %s117 = sand.u32 %s27, 1
          %s118 = scalar_lea.sflag [#allocation3], %s117
          %s119 = sand.u32 %s27, 1
          %s120 = smul.addr %s119, 8
          %s121 = scalar_lea.vmem [#allocation2], %s120
          %s123 = ssub.s32 128, 128
          %124 = vsyncadd %s118, %s123
          %s125 = smul.addr %s17, 128
          %s126 = scalar_lea.hbm %s0, %s125
          %s128 = sshll.u32 %s121, 4
          %s129 = int_to_ptr.vmem [resolvable:$true] %s128
          %131 = dma.hbm_to_vmem [thread:$0]  %s126, 128, %s129, %s118
        $region20: #{tpu_custom_call.1} parent=15 // pred_fallthru
          _
        // Predicated region
        $region21: #{tpu_custom_call.1} parent=15 // pred_check
          %p132 = pneg %p63
        $region22: #{tpu_custom_call.1} parent=15 // pred_check_branch
          %134 = sbr.rel (%p132) target = $region24
        $region23: #{tpu_custom_call.1} parent=15 // pred_region
          %s135 = sand.u32 %s53, 1
          %s136 = scalar_lea.sflag [#allocation6], %s135
          %s137 = sand.u32 %s53, 1
          %s138 = smul.addr %s137, 8
          %s139 = scalar_lea.vmem [#allocation5], %s138
          %s141 = ssub.s32 128, 128
          %142 = vsyncadd %s136, %s141
          %s143 = smul.addr %s17, 128
          %s144 = scalar_lea.hbm %s1, %s143
          %s146 = sshll.u32 %s139, 4
          %s147 = int_to_ptr.vmem [resolvable:$true] %s146
          %149 = dma.hbm_to_vmem [thread:$0]  %s144, 128, %s147, %s136
        $region24: #{tpu_custom_call.1} parent=15 // pred_fallthru
          _
      $region16: #{tpu_custom_call.1} parent=5 // pred_fallthru
        _
      %p150 = scmp.le.s32.totalorder 1, %s17
      %p151 = scmp.lt.s32.totalorder %s17, 3
      %p152 = pnand %p150, %p151
      %p153 = pneg %p152
      // Predicated region
      $region25: #{tpu_custom_call.1} parent=5 // pred_check
        _
      $region26: #{tpu_custom_call.1} parent=5 // pred_check_branch
        %155 = sbr.rel (%p152) target = $region28
      $region27: #{tpu_custom_call.1} parent=5 // pred_region
        %s156 = ssub.s32 %s17, 1
        %s157 = sand.u32 %s30, 1
        %s158 = scalar_lea.sflag [#allocation3], %s157
        %s159 = sand.u32 %s30, 1
        %s160 = smul.addr %s159, 8
        %s161 = scalar_lea.vmem [#allocation2], %s160
        // Predicated region
        $region29: #{tpu_custom_call.1} parent=27 // pred_check
          %p162 = pneg %p43
        $region30: #{tpu_custom_call.1} parent=27 // pred_check_branch
          %164 = sbr.rel (%p162) target = $region32
        $region31: #{tpu_custom_call.1} parent=27 // pred_region
          %165 = dma.done %s158, 128
        $region32: #{tpu_custom_call.1} parent=27 // pred_fallthru
          _
        %s166 = sand.u32 %s56, 1
        %s167 = scalar_lea.sflag [#allocation6], %s166
        %s168 = sand.u32 %s56, 1
        %s169 = smul.addr %s168, 8
        %s170 = scalar_lea.vmem [#allocation5], %s169
        // Predicated region
        $region33: #{tpu_custom_call.1} parent=27 // pred_check
          %p171 = pneg %p69
        $region34: #{tpu_custom_call.1} parent=27 // pred_check_branch
          %173 = sbr.rel (%p171) target = $region36
        $region35: #{tpu_custom_call.1} parent=27 // pred_region
          %174 = dma.done %s167, 128
        $region36: #{tpu_custom_call.1} parent=27 // pred_fallthru
          _
        %s175 = sand.u32 %s30, 1
        %s176 = scalar_lea.sflag [#allocation3], %s175
        %s177 = sand.u32 %s30, 1
        %s178 = smul.addr %s177, 8
        %s179 = scalar_lea.vmem [#allocation2], %s178
        %p180 = pneg %p43
        %p181 = pneg %p40
        %s182 = sand.u32 %s56, 1
        %s183 = scalar_lea.sflag [#allocation6], %s182
        %s184 = sand.u32 %s56, 1
        %s185 = smul.addr %s184, 8
        %s186 = scalar_lea.vmem [#allocation5], %s185
        %p187 = pneg %p69
        %p188 = pneg %p66
        %p189 = pneg %p95
        %p190 = pneg %p92
        %s191 = sand.u32 %s82, 1
        %s192 = scalar_lea.sflag [#allocation4], %s191
        %s193 = sand.u32 %s82, 1
        %s194 = smul.addr %s193, 24
        %s195 = scalar_lea.vmem [#allocation7], %s194
        %v196 = vld [vmem:[%s161] sm:$0xff]
        %v197 = vld [vmem:[%s170] sm:$0xff]
        %v198 = vmul.f32 %v196, %v197
        %v199 = vadd.f32 %v198, 0.0
        %v200 = vadd.f32 %v196, 0.0
        %v201 = vadd.f32 %v197, 0.0
        %202 = vst [vmem:[%s195] sm:$0xff] %v199
        %s203 = scalar_lea.vmem %s195, 8 [#allocation7]
        %204 = vst [vmem:[%s203] sm:$0xff] %v200
        %s205 = scalar_lea.vmem %s195, 16 [#allocation7]
        %206 = vst [vmem:[%s205] sm:$0xff] %v201
        %s207 = sand.u32 %s82, 1
        %s208 = scalar_lea.sflag [#allocation4], %s207
        %s209 = sand.u32 %s82, 1
        %s210 = smul.addr %s209, 24
        %s211 = scalar_lea.vmem [#allocation7], %s210
        // Predicated region
        $region37: #{tpu_custom_call.1} parent=27 // pred_check
          %p212 = pneg %p92
        $region38: #{tpu_custom_call.1} parent=27 // pred_check_branch
          %214 = sbr.rel (%p212) target = $region40
        $region39: #{tpu_custom_call.1} parent=27 // pred_region
          %s216 = ssub.s32 384, 384
          %217 = vsyncadd %s208, %s216
          %s218 = smul.addr %s22, 3
          %s219 = smul.addr %s218, 128
          %s220 = scalar_lea.hbm %s2, %s219
          %s221 = sshll.u32 %s211, 4
          %s222 = int_to_ptr.vmem [resolvable:$true] %s221
          %227 = dma.vmem_to_hbm [thread:$0]  %s222, 384, %s220, %s208, 128, 128, 8
        $region40: #{tpu_custom_call.1} parent=27 // pred_fallthru
          _
      $region28: #{tpu_custom_call.1} parent=5 // pred_fallthru
        _
      %p228 = scmp.le.s32.totalorder 2, %s17
      // Predicated region
      $region41: #{tpu_custom_call.1} parent=5 // pred_check
        %p229 = pneg %p228
      $region42: #{tpu_custom_call.1} parent=5 // pred_check_branch
        %231 = sbr.rel (%p229) target = $region44
      $region43: #{tpu_custom_call.1} parent=5 // pred_region
        %s232 = ssub.s32 %s17, 2
        // Predicated region
        $region45: #{tpu_custom_call.1} parent=43 // pred_check
          %p233 = pneg %p98
        $region46: #{tpu_custom_call.1} parent=43 // pred_check_branch
          %235 = sbr.rel (%p233) target = $region48
        $region47: #{tpu_custom_call.1} parent=43 // pred_region
          %s236 = sand.u32 %s83, 1
          %s237 = scalar_lea.sflag [#allocation4], %s236
          %s238 = sand.u32 %s83, 1
          %s239 = smul.addr %s238, 24
          %s240 = scalar_lea.vmem [#allocation7], %s239
          %241 = dma.done %s237, 384
        $region48: #{tpu_custom_call.1} parent=43 // pred_fallthru
          _
      $region44: #{tpu_custom_call.1} parent=5 // pred_fallthru
        _
    $region6: #{tpu_custom_call.1} parent=1 // loop_footer
      %s21 = sadd.s32 1, %s17
    $region7: #{tpu_custom_call.1} parent=1 // loop_footer_branch
      %16 = sbr.rel target = $region3
    $region8: #{tpu_custom_call.1} parent=1 // loop_exit
      _
    %242 = vsyncpa [#allocation3], 1
    %s243 = scalar_lea.sflag [#allocation3], 1
    %244 = vsyncpa %s243, 1
    %245 = vsyncpa [#allocation6], 1
    %s246 = scalar_lea.sflag [#allocation6], 1
    %247 = vsyncpa %s246, 1
    %248 = vsyncpa [#allocation4], 1
    %s249 = scalar_lea.sflag [#allocation4], 1
    %250 = vsyncpa %s249, 1

</llo_original>
